<compile_context>
chip_gen: v5e
topology: v5e:2x2
jax: 0.10.0
libtpu: 0.0.40
codegen_flags: <defaults>
</compile_context>

<pallas_src>
import jax
import jax.numpy as jnp
from jax.experimental import pallas as pl
from jax.experimental.pallas import tpu as pltpu

LANE = 128   # TPU lane width
SUB = 8      # TPU sublane count


def _round_up(x, m):
    return (x + m - 1) // m * m


def _make_kernel(s_real, sp):
    """Build the kernel body with the static (unpadded) sequence length baked in."""
    inv_s = 1.0 / float(s_real)

    def kernel(ids_ref,                      # VMEM (TB, Sp) int32  token ids
               emb_ref,                      # VMEM (Vp, Dp) f32    resident table
               w12t_ref, b12_ref,            # VMEM (Dp, Dp), (1, Dp) folded attn linears
               w3t_ref, b3_ref,              # VMEM (Dp, Cp), (1, Cp) output linear
               o_ref):                       # VMEM (TB, Cp) lane-dense output
        tb = ids_ref.shape[0]
        vp, dp = emb_ref.shape

        # ---- embedding gather, fully on-chip: one-hot(ids) @ table on the MXU ----
        ids = ids_ref[...]                                        # (TB, Sp) int32
        iota_v = jax.lax.broadcasted_iota(jnp.int32, (tb, sp, vp), 2)
        onehot = (ids[:, :, None] == iota_v).astype(jnp.float32)  # (TB, Sp, Vp)
        x = jnp.dot(onehot.reshape(tb * sp, vp), emb_ref[...],
                    preferred_element_type=jnp.float32).reshape(tb, sp, dp)

        if sp != s_real:
            # Zero out padded sequence positions (trace-time constant branch).
            seq_mask = jax.lax.broadcasted_iota(jnp.int32, (tb, sp), 1) < s_real
            x = x * seq_mask[:, :, None].astype(jnp.float32)

        # ---- query: mean over seq, then the two (folded) attn linears (one dot) ----
        q = jnp.sum(x, axis=1) * inv_s                            # (TB, Dp)
        q = jnp.dot(q, w12t_ref[...],
                    preferred_element_type=jnp.float32) + b12_ref[...]

        # ---- attention scores + softmax over the sequence axis ----
        scores = jnp.sum(x * q[:, None, :], axis=2)               # (TB, Sp)
        if sp != s_real:
            scores = jnp.where(seq_mask, scores, -1e30)
        m = jnp.max(scores, axis=1, keepdims=True)                # (TB, 1)
        e = jnp.exp(scores - m)                                   # (TB, Sp)
        if sp != s_real:
            e = jnp.where(seq_mask, e, 0.0)
        denom = jnp.sum(e, axis=1, keepdims=True)                 # (TB, 1)
        inv = pl.reciprocal(denom, approx=True)                   # EUP vrcp seed
        inv = inv * (2.0 - denom * inv)                           # 1 Newton step -> ~f32
        attn = e * inv                                            # (TB, Sp)

        # ---- attention-weighted pooling + final linear ----
        pooled = jnp.sum(x * attn[:, :, None], axis=1)            # (TB, Dp)
        o_ref[...] = jnp.dot(pooled, w3t_ref[...],
                             preferred_element_type=jnp.float32) + b3_ref[...]

    return kernel


def model_q3_forward(token_ids, emb_table, w1, b1, w2, b2, w3, b3,
                     *, max_batch_tile=64):
    """token_ids: (B,S) int; emb_table: (V,D); w1,w2: (D,D); b1,b2: (D,); w3: (C,D); b3: (C,)."""
    B, S = token_ids.shape
    V, D = emb_table.shape
    C = w3.shape[0]

    dp = _round_up(D, LANE)     # lane-dense embedding dim
    cp = _round_up(C, LANE)     # lane-dense output width
    vp = _round_up(V, LANE)     # lane-dense vocab (MXU contraction dim of the gather)
    sp = _round_up(S, SUB)      # sublane-dense sequence length

    f32 = jnp.float32

    # Batch tile: multiple of 8 sublanes; cap so >=2 grid steps exist when the padded
    # batch allows it (so the "parallel" axis actually shards across v7x's 2 TCs).
    b8 = _round_up(B, SUB)
    tb = min(max_batch_tile, b8)
    if b8 >= 2 * SUB:
        tb = min(tb, max(SUB, (b8 // 2) // SUB * SUB))
    bp = _round_up(B, tb)
    grid = (bp // tb,)

    # Zero-padding keeps the math exact: padded D/C columns and padded vocab rows are 0,
    # padded batch rows are sliced off, padded seq positions are masked in-kernel.
    ids_p = jnp.zeros((bp, sp), jnp.int32).at[:B, :S].set(token_ids.astype(jnp.int32))
    emb_p = jnp.zeros((vp, dp), f32).at[:V, :D].set(emb_table.astype(f32))

    # Fold the two attention linears (no nonlinearity between them in the reference):
    #   q @ W1^T + b1 -> then @ W2^T + b2   ==   q @ (W1^T @ W2^T) + (b1 @ W2^T + b2)
    w12t = jnp.dot(w1.T.astype(f32), w2.T.astype(f32), precision="highest")
    b12 = jnp.dot(b1.astype(f32), w2.T.astype(f32), precision="highest") + b2.astype(f32)
    w12t_p = jnp.zeros((dp, dp), f32).at[:D, :D].set(w12t)
    b12_p = jnp.zeros((1, dp), f32).at[0, :D].set(b12)
    w3t_p = jnp.zeros((dp, cp), f32).at[:D, :C].set(w3.T.astype(f32))
    b3_p = jnp.zeros((1, cp), f32).at[0, :C].set(b3.astype(f32))

    rep = lambda i: (0, 0)   # grid-invariant (resident) blocks

    cost = pl.CostEstimate(
        flops=int(2 * bp * sp * vp * dp          # one-hot gather matmul
                  + 6 * bp * sp * dp             # mean / scores / pooling
                  + 2 * bp * dp * dp             # folded query linear
                  + 2 * bp * dp * cp),           # output linear
        transcendentals=int(bp * sp + bp),
        bytes_accessed=int(bp * sp * 4 + vp * dp * 4
                           + (dp * dp + dp * cp + dp + cp) * 4 + bp * cp * 4),
    )

    out = pl.pallas_call(
        _make_kernel(S, sp),
        out_shape=jax.ShapeDtypeStruct((bp, cp), f32),
        grid_spec=pltpu.PrefetchScalarGridSpec(
            num_scalar_prefetch=0,
            grid=grid,
            in_specs=[
                pl.BlockSpec((tb, sp), lambda i: (i, 0)),   # per-tile token ids
                pl.BlockSpec((vp, dp), rep),                # embedding table (resident)
                pl.BlockSpec((dp, dp), rep),                # W1^T @ W2^T
                pl.BlockSpec((1, dp), rep),                 # folded bias
                pl.BlockSpec((dp, cp), rep),                # W3^T
                pl.BlockSpec((1, cp), rep),                 # b3
            ],
            out_specs=pl.BlockSpec((tb, cp), lambda i: (i, 0)),
        ),
        compiler_params=pltpu.CompilerParams(
            dimension_semantics=("parallel",),              # batch tiles independent
        ),
        cost_estimate=cost,
    )(ids_p, emb_p, w12t_p, b12_p, w3t_p, b3_p)

    return out[:B, :C]


def reference_forward(token_ids, emb_table, w1, b1, w2, b2, w3, b3):
    """Pure-JAX reference mirroring the PyTorch Model_Q3 forward."""
    x = emb_table[token_ids]                                   # (B, S, D)
    q = jnp.mean(x, axis=1)                                    # (B, D)
    q = jnp.dot(q, w1.T, precision="highest") + b1             # attn Linear 1
    q = jnp.dot(q, w2.T, precision="highest") + b2             # attn Linear 2
    scores = jnp.einsum("bsd,bd->bs", x, q, precision="highest")
    attn = jax.nn.softmax(scores, axis=1)[:, :, None]          # (B, S, 1)
    pooled = jnp.sum(x * attn, axis=1)                         # (B, D)
    return jnp.dot(pooled, w3.T, precision="highest") + b3     # (B, C)


if __name__ == "__main__":
    # Small shapes consistent with the module's forward.
    vocab_size, embedding_dim, n_class = 20, 32, 4
    batch, seqlen = 2, 8

    key = jax.random.PRNGKey(0)
    ks = jax.random.split(key, 8)

    # Deterministic synthetic parameters (shapes match the module's __init__).
    emb = jax.random.normal(ks[0], (vocab_size, embedding_dim), jnp.float32)
    w1 = jax.random.normal(ks[1], (embedding_dim, embedding_dim), jnp.float32) * 0.1
    b1 = jax.random.normal(ks[2], (embedding_dim,), jnp.float32) * 0.1
    w2 = jax.random.normal(ks[3], (embedding_dim, embedding_dim), jnp.float32) * 0.1
    b2 = jax.random.normal(ks[4], (embedding_dim,), jnp.float32) * 0.1
    w3 = jax.random.normal(ks[5], (n_class, embedding_dim), jnp.float32) * 0.1
    b3 = jax.random.normal(ks[6], (n_class,), jnp.float32) * 0.1
    token_ids = jax.random.randint(ks[7], (batch, seqlen), 0, vocab_size, jnp.int32)

    out = model_q3_forward(token_ids, emb, w1, b1, w2, b2, w3, b3)
    out = jax.block_until_ready(out)

    ref = reference_forward(token_ids, emb, w1, b1, w2, b2, w3, b3)
    assert out.shape == (batch, n_class)
    # Tolerance accommodates MXU f32 pass-decomposition, folded-linear associativity
    # and the EUP reciprocal + Newton refinement.
    assert jnp.allclose(out, ref, atol=2e-3, rtol=2e-3), (out, ref)

    print("KERNEL_OK")
</pallas_src>

<mosaic_0001>
module attributes {stable_mosaic.version = 11 : i64} {
  func.func @kernel(%arg0: i32, %arg1: memref<8x8xi32, #tpu.memory_space<vmem>>, %arg2: memref<128x128xf32, #tpu.memory_space<vmem>>, %arg3: memref<128x128xf32, #tpu.memory_space<vmem>>, %arg4: memref<1x128xf32, #tpu.memory_space<vmem>>, %arg5: memref<128x128xf32, #tpu.memory_space<vmem>>, %arg6: memref<1x128xf32, #tpu.memory_space<vmem>>, %arg7: memref<8x128xf32, #tpu.memory_space<vmem>>) attributes {dimension_semantics = [#tpu.dimension_semantics<parallel>], iteration_bounds = array<i64: 1>, scalar_prefetch = 0 : i64, scratch_operands = 0 : i64, tpu.core_type = #tpu.core_type<tc>, window_params = [{transform_indices = @transform_0, window_bounds = array<i64: 8, 8>}, {pipeline_mode = #tpu.pipeline_mode<synchronous>, transform_indices = @transform_1, window_bounds = array<i64: 128, 128>}, {pipeline_mode = #tpu.pipeline_mode<synchronous>, transform_indices = @transform_2, window_bounds = array<i64: 128, 128>}, {pipeline_mode = #tpu.pipeline_mode<synchronous>, transform_indices = @transform_3, window_bounds = array<i64: 1, 128>}, {pipeline_mode = #tpu.pipeline_mode<synchronous>, transform_indices = @transform_4, window_bounds = array<i64: 128, 128>}, {pipeline_mode = #tpu.pipeline_mode<synchronous>, transform_indices = @transform_5, window_bounds = array<i64: 1, 128>}, {transform_indices = @transform_6, window_bounds = array<i64: 8, 128>}]} {
    %c0 = arith.constant 0 : index
    %c0_0 = arith.constant 0 : index
    %0 = vector.load %arg1[%c0, %c0_0] : memref<8x8xi32, #tpu.memory_space<vmem>>, vector<8x8xi32>
    %1 = tpu.iota {dimensions = array<i32: 2>} : vector<8x8x128xi32>
    %2 = vector.shape_cast %0 : vector<8x8xi32> to vector<8x8x1xi32>
    %3 = vector.broadcast %2 : vector<8x8x1xi32> to vector<8x8x128xi32>
    %4 = arith.cmpi eq, %3, %1 : vector<8x8x128xi32>
    %5 = arith.extui %4 : vector<8x8x128xi1> to vector<8x8x128xi32>
    %6 = arith.sitofp %5 : vector<8x8x128xi32> to vector<8x8x128xf32>
    %7 = vector.shape_cast %6 : vector<8x8x128xf32> to vector<64x128xf32>
    %c0_1 = arith.constant 0 : index
    %c0_2 = arith.constant 0 : index
    %8 = vector.load %arg2[%c0_1, %c0_2] : memref<128x128xf32, #tpu.memory_space<vmem>>, vector<128x128xf32>
    %cst = arith.constant dense<0.000000e+00> : vector<64x128xf32>
    %9 = tpu.matmul %7, %8, %cst {dimension_numbers = #tpu.dot_dimension_numbers<[1], [0], [0], [1], [0, 0, 1, 1], [], []>} : vector<64x128xf32>, vector<128x128xf32>, vector<64x128xf32> -> vector<64x128xf32>
    %10 = vector.shape_cast %9 : vector<64x128xf32> to vector<8x8x128xf32>
    %cst_3 = arith.constant dense<0.000000e+00> : vector<8x128xf32>
    %11 = vector.multi_reduction <add>, %10, %cst_3 [1] : vector<8x8x128xf32> to vector<8x128xf32>
    %cst_4 = arith.constant 1.250000e-01 : f32
    %12 = vector.broadcast %cst_4 : f32 to vector<8x128xf32>
    %13 = arith.mulf %11, %12 : vector<8x128xf32>
    %c0_5 = arith.constant 0 : index
    %c0_6 = arith.constant 0 : index
    %14 = vector.load %arg3[%c0_5, %c0_6] : memref<128x128xf32, #tpu.memory_space<vmem>>, vector<128x128xf32>
    %cst_7 = arith.constant dense<0.000000e+00> : vector<8x128xf32>
    %15 = tpu.matmul %13, %14, %cst_7 {dimension_numbers = #tpu.dot_dimension_numbers<[1], [0], [0], [1], [0, 0, 1, 1], [], []>} : vector<8x128xf32>, vector<128x128xf32>, vector<8x128xf32> -> vector<8x128xf32>
    %c0_8 = arith.constant 0 : index
    %c0_9 = arith.constant 0 : index
    %16 = vector.load %arg4[%c0_8, %c0_9] : memref<1x128xf32, #tpu.memory_space<vmem>>, vector<1x128xf32>
    %17 = vector.broadcast %16 : vector<1x128xf32> to vector<8x128xf32>
    %18 = arith.addf %15, %17 : vector<8x128xf32>
    %19 = vector.shape_cast %18 : vector<8x128xf32> to vector<8x1x128xf32>
    %20 = vector.broadcast %19 : vector<8x1x128xf32> to vector<8x8x128xf32>
    %21 = arith.mulf %10, %20 : vector<8x8x128xf32>
    %cst_10 = arith.constant dense<0.000000e+00> : vector<8x8xf32>
    %22 = vector.multi_reduction <add>, %21, %cst_10 [2] : vector<8x8x128xf32> to vector<8x8xf32>
    %cst_11 = arith.constant dense<0xFF800000> : vector<8xf32>
    %23 = vector.multi_reduction <maximumf>, %22, %cst_11 [1] : vector<8x8xf32> to vector<8xf32>
    %24 = vector.shape_cast %23 : vector<8xf32> to vector<8x1xf32>
    %25 = vector.broadcast %24 : vector<8x1xf32> to vector<8x8xf32>
    %26 = arith.subf %22, %25 : vector<8x8xf32>
    %27 = math.exp %26 : vector<8x8xf32>
    %cst_12 = arith.constant dense<0.000000e+00> : vector<8xf32>
    %28 = vector.multi_reduction <add>, %27, %cst_12 [1] : vector<8x8xf32> to vector<8xf32>
    %29 = vector.shape_cast %28 : vector<8xf32> to vector<8x1xf32>
    %30 = tpu.reciprocal %29 {approx = true} : vector<8x1xf32> -> vector<8x1xf32>
    %31 = arith.mulf %29, %30 : vector<8x1xf32>
    %cst_13 = arith.constant 2.000000e+00 : f32
    %32 = vector.broadcast %cst_13 : f32 to vector<8x1xf32>
    %33 = arith.subf %32, %31 : vector<8x1xf32>
    %34 = arith.mulf %30, %33 : vector<8x1xf32>
    %35 = vector.broadcast %34 : vector<8x1xf32> to vector<8x8xf32>
    %36 = arith.mulf %27, %35 : vector<8x8xf32>
    %37 = vector.shape_cast %36 : vector<8x8xf32> to vector<8x8x1xf32>
    %38 = vector.broadcast %37 : vector<8x8x1xf32> to vector<8x8x128xf32>
    %39 = arith.mulf %10, %38 : vector<8x8x128xf32>
    %cst_14 = arith.constant dense<0.000000e+00> : vector<8x128xf32>
    %40 = vector.multi_reduction <add>, %39, %cst_14 [1] : vector<8x8x128xf32> to vector<8x128xf32>
    %c0_15 = arith.constant 0 : index
    %c0_16 = arith.constant 0 : index
    %41 = vector.load %arg5[%c0_15, %c0_16] : memref<128x128xf32, #tpu.memory_space<vmem>>, vector<128x128xf32>
    %cst_17 = arith.constant dense<0.000000e+00> : vector<8x128xf32>
    %42 = tpu.matmul %40, %41, %cst_17 {dimension_numbers = #tpu.dot_dimension_numbers<[1], [0], [0], [1], [0, 0, 1, 1], [], []>} : vector<8x128xf32>, vector<128x128xf32>, vector<8x128xf32> -> vector<8x128xf32>
    %c0_18 = arith.constant 0 : index
    %c0_19 = arith.constant 0 : index
    %43 = vector.load %arg6[%c0_18, %c0_19] : memref<1x128xf32, #tpu.memory_space<vmem>>, vector<1x128xf32>
    %44 = vector.broadcast %43 : vector<1x128xf32> to vector<8x128xf32>
    %45 = arith.addf %42, %44 : vector<8x128xf32>
    %c0_20 = arith.constant 0 : index
    %c0_21 = arith.constant 0 : index
    %46 = vector.load %arg7[%c0_20, %c0_21] : memref<8x128xf32, #tpu.memory_space<vmem>>, vector<8x128xf32>
    tpu.vector_store %arg7[%c0_20, %c0_21], %45 {strides = array<i32>} : memref<8x128xf32, #tpu.memory_space<vmem>>, vector<8x128xf32>,
    return
  }
  func.func @transform_0(%arg0: i32) -> (i32, i32) {
    %c0_i32 = arith.constant 0 : i32
    %c0_i32_0 = arith.constant 0 : i32
    return %arg0, %c0_i32 : i32, i32
  }
  func.func @transform_1(%arg0: i32) -> (i32, i32) {
    %c0_i32 = arith.constant 0 : i32
    %c0_i32_0 = arith.constant 0 : i32
    %c0_i32_1 = arith.constant 0 : i32
    return %c0_i32, %c0_i32_0 : i32, i32
  }
  func.func @transform_2(%arg0: i32) -> (i32, i32) {
    %c0_i32 = arith.constant 0 : i32
    %c0_i32_0 = arith.constant 0 : i32
    %c0_i32_1 = arith.constant 0 : i32
    return %c0_i32, %c0_i32_0 : i32, i32
  }
  func.func @transform_3(%arg0: i32) -> (i32, i32) {
    %c0_i32 = arith.constant 0 : i32
    %c0_i32_0 = arith.constant 0 : i32
    %c0_i32_1 = arith.constant 0 : i32
    return %c0_i32, %c0_i32_0 : i32, i32
  }
  func.func @transform_4(%arg0: i32) -> (i32, i32) {
    %c0_i32 = arith.constant 0 : i32
    %c0_i32_0 = arith.constant 0 : i32
    %c0_i32_1 = arith.constant 0 : i32
    return %c0_i32, %c0_i32_0 : i32, i32
  }
  func.func @transform_5(%arg0: i32) -> (i32, i32) {
    %c0_i32 = arith.constant 0 : i32
    %c0_i32_0 = arith.constant 0 : i32
    %c0_i32_1 = arith.constant 0 : i32
    return %c0_i32, %c0_i32_0 : i32, i32
  }
  func.func @transform_6(%arg0: i32) -> (i32, i32) {
    %c0_i32 = arith.constant 0 : i32
    %c0_i32_0 = arith.constant 0 : i32
    return %arg0, %c0_i32 : i32, i32
  }
}

</mosaic_0001>

<llo_original>
// kernel: tpu_custom_call.1
$region0: #{tpu_custom_call.1}
  #allocation0 [shape = 'u32[]', space=smem, size = 0x4, offset = 0x4, fixed_abs, tag = 'smem constant byte address 0x4 - core index']
  #allocation1 [shape = 'u32[72,128]{1,0:T(1,128)}', space=vmem, size = 0x9000, scoped, tag = 'internal scratch']
  %s0 = inlined_call_operand.hbm [shape: s32[8,8], index: 0, kind: input, shape index: {}]
  %s1 = inlined_call_operand.hbm [shape: f32[128,128], index: 1, kind: input, shape index: {}]
  %s2 = inlined_call_operand.hbm [shape: f32[128,128], index: 2, kind: input, shape index: {}]
  %s3 = inlined_call_operand.vmem [shape: f32[1,128], index: 3, kind: input, shape index: {}]
  %s4 = inlined_call_operand.hbm [shape: f32[128,128], index: 4, kind: input, shape index: {}]
  %s5 = inlined_call_operand.vmem [shape: f32[1,128], index: 5, kind: input, shape index: {}]
  %s6 = inlined_call_operand.hbm [shape: f32[8,128], index: 6, kind: output, shape index: {}]
  %s7 = sld [smem:[#allocation0]]
  $region50: #{tpu_custom_call.1} parent=0
    _
  %s9 = ssub.s32 1, %s7
  %s10 = scalar_select 0, %s9, %s7
  $region1: #{tpu_custom_call.1} parent=0
    #allocation2 [shape = 'u8[4096]{0}', space=vmem, size = 0x1000, scoped, tag = 'input window, operand 0, single buffered']
    #allocation3 [shape = 's32[1]{0}', space=sflag, size = 0x4, scoped, tag = 'scoped memory for tpu_custom_call.1']
    #allocation4 [shape = 's32[1]{0}', space=sflag, size = 0x4, scoped, tag = 'scoped memory for tpu_custom_call.1']
    #allocation5 [shape = 'u8[65536]{0}', space=vmem, size = 0x10000, scoped, tag = 'input window, operand 1, single buffered']
    #allocation6 [shape = 's32[1]{0}', space=sflag, size = 0x4, scoped, tag = 'scoped memory for tpu_custom_call.1']
    #allocation7 [shape = 'u8[65536]{0}', space=vmem, size = 0x10000, scoped, tag = 'input window, operand 2, single buffered']
    #allocation8 [shape = 'u8[65536]{0}', space=vmem, size = 0x10000, scoped, tag = 'input window, operand 4, single buffered']
    #allocation9 [shape = 's32[1]{0}', space=sflag, size = 0x4, scoped, tag = 'scoped memory for tpu_custom_call.1']
    #allocation10 [shape = 'u8[4096]{0}', space=vmem, size = 0x1000, scoped, tag = 'output window, operand 0, single buffered']
    %11 = vsyncpa [#allocation3], 0
    %12 = vsyncpa [#allocation6], 0
    %13 = vsyncpa [#allocation9], 0
    %14 = vsyncpa [#allocation4], 0
    // Predicated region
    $region2: #{tpu_custom_call.1} parent=1 // pred_check
      _
    $region3: #{tpu_custom_call.1} parent=1 // pred_check_branch
      %16 = sbr.rel (0) target = $region5
    $region4: #{tpu_custom_call.1} parent=1 // pred_region
      %18 = vsyncadd [#allocation3], 0
      %s20 = sshll.u32 %s0, 4
      %s21 = int_to_ptr.hbm [resolvable:$true] %s20
      %s22 = sshll.u32 [#allocation2], 4
      %s23 = int_to_ptr.vmem [resolvable:$true] %s22
      %25 = dma.hbm_to_vmem [thread:$0]  %s21, 128, %s23, [#allocation3]
    $region5: #{tpu_custom_call.1} parent=1 // pred_fallthru
      _
    // Predicated region
    $region6: #{tpu_custom_call.1} parent=1 // pred_check
      _
    $region7: #{tpu_custom_call.1} parent=1 // pred_check_branch
      %27 = sbr.rel (0) target = $region9
    $region8: #{tpu_custom_call.1} parent=1 // pred_region
      %29 = vsyncadd [#allocation6], 0
      %s30 = sshll.u32 %s1, 4
      %s31 = int_to_ptr.hbm [resolvable:$true] %s30
      %s32 = sshll.u32 [#allocation5], 4
      %s33 = int_to_ptr.vmem [resolvable:$true] %s32
      %38 = dma.hbm_to_vmem [thread:$0]  %s31, 2048, %s33, [#allocation6], 128, 128, 8
    $region9: #{tpu_custom_call.1} parent=1 // pred_fallthru
      _
    // Predicated region
    $region10: #{tpu_custom_call.1} parent=1 // pred_check
      _
    $region11: #{tpu_custom_call.1} parent=1 // pred_check_branch
      %40 = sbr.rel (0) target = $region13
    $region12: #{tpu_custom_call.1} parent=1 // pred_region
      %42 = vsyncadd [#allocation6], 0
      %s43 = sshll.u32 %s2, 4
      %s44 = int_to_ptr.hbm [resolvable:$true] %s43
      %s45 = sshll.u32 [#allocation7], 4
      %s46 = int_to_ptr.vmem [resolvable:$true] %s45
      %51 = dma.hbm_to_vmem [thread:$0]  %s44, 2048, %s46, [#allocation6], 128, 128, 8
    $region13: #{tpu_custom_call.1} parent=1 // pred_fallthru
      _
    // Predicated region
    $region14: #{tpu_custom_call.1} parent=1 // pred_check
      _
    $region15: #{tpu_custom_call.1} parent=1 // pred_check_branch
      %53 = sbr.rel (0) target = $region17
    $region16: #{tpu_custom_call.1} parent=1 // pred_region
      _
    $region17: #{tpu_custom_call.1} parent=1 // pred_fallthru
      _
    // Predicated region
    $region18: #{tpu_custom_call.1} parent=1 // pred_check
      _
    $region19: #{tpu_custom_call.1} parent=1 // pred_check_branch
      %55 = sbr.rel (0) target = $region21
    $region20: #{tpu_custom_call.1} parent=1 // pred_region
      %57 = vsyncadd [#allocation9], 0
      %s58 = sshll.u32 %s4, 4
      %s59 = int_to_ptr.hbm [resolvable:$true] %s58
      %s60 = sshll.u32 [#allocation8], 4
      %s61 = int_to_ptr.vmem [resolvable:$true] %s60
      %66 = dma.hbm_to_vmem [thread:$0]  %s59, 2048, %s61, [#allocation9], 128, 128, 8
    $region21: #{tpu_custom_call.1} parent=1 // pred_fallthru
      _
    // Predicated region
    $region22: #{tpu_custom_call.1} parent=1 // pred_check
      _
    $region23: #{tpu_custom_call.1} parent=1 // pred_check_branch
      %68 = sbr.rel (0) target = $region25
    $region24: #{tpu_custom_call.1} parent=1 // pred_region
      _
    $region25: #{tpu_custom_call.1} parent=1 // pred_fallthru
      _
    // Predicated region
    $region26: #{tpu_custom_call.1} parent=1 // pred_check
      _
    $region27: #{tpu_custom_call.1} parent=1 // pred_check_branch
      %70 = sbr.rel (0) target = $region29
    $region28: #{tpu_custom_call.1} parent=1 // pred_region
      %72 = dma.done [#allocation3], 128
    $region29: #{tpu_custom_call.1} parent=1 // pred_fallthru
      _
    // Predicated region
    $region30: #{tpu_custom_call.1} parent=1 // pred_check
      _
    $region31: #{tpu_custom_call.1} parent=1 // pred_check_branch
      %74 = sbr.rel (0) target = $region33
    $region32: #{tpu_custom_call.1} parent=1 // pred_region
      %76 = dma.done [#allocation6], 2048
    $region33: #{tpu_custom_call.1} parent=1 // pred_fallthru
      _
    // Predicated region
    $region34: #{tpu_custom_call.1} parent=1 // pred_check
      _
    $region35: #{tpu_custom_call.1} parent=1 // pred_check_branch
      %78 = sbr.rel (0) target = $region37
    $region36: #{tpu_custom_call.1} parent=1 // pred_region
      %80 = dma.done [#allocation6], 2048
    $region37: #{tpu_custom_call.1} parent=1 // pred_fallthru
      _
    // Predicated region
    $region38: #{tpu_custom_call.1} parent=1 // pred_check
      _
    $region39: #{tpu_custom_call.1} parent=1 // pred_check_branch
      %82 = sbr.rel (0) target = $region41
    $region40: #{tpu_custom_call.1} parent=1 // pred_region
      %84 = dma.done [#allocation9], 2048
    $region41: #{tpu_custom_call.1} parent=1 // pred_fallthru
      _
    %v85 = vld [vmem:[#allocation2] sm:$0xff]
    %v86 = vlaneseq
    %v87 = vand.u32 %v86, 127
    %v88 = vperm.slane %v85, 0
    %v89 = vlaneseq
    %v90 = vshrl.u32 %v89, 7
    %92 = vset.pattern.permute.xlu0 %v90
    %93 = vperm.xlu0 %92, %v88
    %v94 = vpop.permute.xlu0 %93
    %v95 = vperm.slane %v85, 1
    %v96 = vlaneseq
    %v97 = vshrl.u32 %v96, 7
    %99 = vset.pattern.permute.xlu0 %v97
    %100 = vperm.xlu0 %99, %v95
    %v101 = vpop.permute.xlu0 %100
    %v102 = vperm.slane %v85, 2
    %v103 = vlaneseq
    %v104 = vshrl.u32 %v103, 7
    %106 = vset.pattern.permute.xlu0 %v104
    %107 = vperm.xlu0 %106, %v102
    %v108 = vpop.permute.xlu0 %107
    %v109 = vperm.slane %v85, 3
    %v110 = vlaneseq
    %v111 = vshrl.u32 %v110, 7
    %113 = vset.pattern.permute.xlu0 %v111
    %114 = vperm.xlu0 %113, %v109
    %v115 = vpop.permute.xlu0 %114
    %v116 = vperm.slane %v85, 4
    %v117 = vlaneseq
    %v118 = vshrl.u32 %v117, 7
    %120 = vset.pattern.permute.xlu0 %v118
    %121 = vperm.xlu0 %120, %v116
    %v122 = vpop.permute.xlu0 %121
    %v123 = vperm.slane %v85, 5
    %v124 = vlaneseq
    %v125 = vshrl.u32 %v124, 7
    %127 = vset.pattern.permute.xlu0 %v125
    %128 = vperm.xlu0 %127, %v123
    %v129 = vpop.permute.xlu0 %128
    %v130 = vperm.slane %v85, 6
    %v131 = vlaneseq
    %v132 = vshrl.u32 %v131, 7
    %134 = vset.pattern.permute.xlu0 %v132
    %135 = vperm.xlu0 %134, %v130
    %v136 = vpop.permute.xlu0 %135
    %v137 = vperm.slane %v85, 7
    %v138 = vlaneseq
    %v139 = vshrl.u32 %v138, 7
    %141 = vset.pattern.permute.xlu0 %v139
    %142 = vperm.xlu0 %141, %v137
    %v143 = vpop.permute.xlu0 %142
    %vm144 = vcmp.eq.s32.totalorder %v94, %v87
    %vm145 = vcmp.eq.s32.totalorder %v101, %v87
    %vm146 = vcmp.eq.s32.totalorder %v108, %v87
    %vm147 = vcmp.eq.s32.totalorder %v115, %v87
    %vm148 = vcmp.eq.s32.totalorder %v122, %v87
    %vm149 = vcmp.eq.s32.totalorder %v129, %v87
    %vm150 = vcmp.eq.s32.totalorder %v136, %v87
    %vm151 = vcmp.eq.s32.totalorder %v143, %v87
    %v152 = vsel %vm144, 1, 0
    %v153 = vsel %vm145, 1, 0
    %v154 = vsel %vm146, 1, 0
    %v155 = vsel %vm147, 1, 0
    %v156 = vsel %vm148, 1, 0
    %v157 = vsel %vm149, 1, 0
    %v158 = vsel %vm150, 1, 0
    %v159 = vsel %vm151, 1, 0
    %v160 = vcvt.s32.f32 %v152
    %v161 = vcvt.s32.f32 %v153
    %v162 = vcvt.s32.f32 %v154
    %v163 = vcvt.s32.f32 %v155
    %v164 = vcvt.s32.f32 %v156
    %v165 = vcvt.s32.f32 %v157
    %v166 = vcvt.s32.f32 %v158
    %v167 = vcvt.s32.f32 %v159
    %v168 = vld [vmem:[#allocation5] sm:$0xff]
    %v169 = vld [vmem:[#allocation5 + $0x8] sm:$0xff]
    %v170 = vld [vmem:[#allocation5 + $0x10] sm:$0xff]
    %v171 = vld [vmem:[#allocation5 + $0x18] sm:$0xff]
    %v172 = vld [vmem:[#allocation5 + $0x20] sm:$0xff]
    %v173 = vld [vmem:[#allocation5 + $0x28] sm:$0xff]
    %v174 = vld [vmem:[#allocation5 + $0x30] sm:$0xff]
    %v175 = vld [vmem:[#allocation5 + $0x38] sm:$0xff]
    %v176 = vld [vmem:[#allocation5 + $0x40] sm:$0xff]
    %v177 = vld [vmem:[#allocation5 + $0x48] sm:$0xff]
    %v178 = vld [vmem:[#allocation5 + $0x50] sm:$0xff]
    %v179 = vld [vmem:[#allocation5 + $0x58] sm:$0xff]
    %v180 = vld [vmem:[#allocation5 + $0x60] sm:$0xff]
    %v181 = vld [vmem:[#allocation5 + $0x68] sm:$0xff]
    %v182 = vld [vmem:[#allocation5 + $0x70] sm:$0xff]
    %v183 = vld [vmem:[#allocation5 + $0x78] sm:$0xff]
    %184 = vmatpush.msra.mxu0 %v183
    %185 = vmatpush.msra.mxu0 %v182
    %186 = vmatpush.msra.mxu0 %v181
    %187 = vmatpush.msra.mxu0 %v180
    %188 = vmatpush.msra.mxu0 %v179
    %189 = vmatpush.msra.mxu0 %v178
    %190 = vmatpush.msra.mxu0 %v177
    %191 = vmatpush.msra.mxu0 %v176
    %192 = vmatpush.msra.mxu0 %v175
    %193 = vmatpush.msra.mxu0 %v174
    %194 = vmatpush.msra.mxu0 %v173
    %195 = vmatpush.msra.mxu0 %v172
    %196 = vmatpush.msra.mxu0 %v171
    %197 = vmatpush.msra.mxu0 %v170
    %198 = vmatpush.msra.mxu0 %v169
    %199 = vmatpush.msra.mxu0 %v168
    %200 = vmatmul.f32.gmra.mxu0 %v160
    %v201 = vpop.f32.mrf.mxu0
    %v202 = vadd.f32 0.0, %v201
    %203 = vmatmul.f32.gmra.mxu0 %v161
    %v204 = vpop.f32.mrf.mxu0
    %v205 = vadd.f32 0.0, %v204
    %206 = vmatmul.f32.gmra.mxu0 %v162
    %v207 = vpop.f32.mrf.mxu0
    %v208 = vadd.f32 0.0, %v207
    %209 = vmatmul.f32.gmra.mxu0 %v163
    %v210 = vpop.f32.mrf.mxu0
    %v211 = vadd.f32 0.0, %v210
    %212 = vmatmul.f32.gmra.mxu0 %v164
    %v213 = vpop.f32.mrf.mxu0
    %v214 = vadd.f32 0.0, %v213
    %215 = vmatmul.f32.gmra.mxu0 %v165
    %v216 = vpop.f32.mrf.mxu0
    %v217 = vadd.f32 0.0, %v216
    %218 = vmatmul.f32.gmra.mxu0 %v166
    %v219 = vpop.f32.mrf.mxu0
    %v220 = vadd.f32 0.0, %v219
    %221 = vmatmul.f32.gmra.mxu0 %v167
    %v222 = vpop.f32.mrf.mxu0
    %v223 = vadd.f32 0.0, %v222
    %224 = vdwg.mxu0
    %v225 = vrot.slane %v202, 4
    %v226 = vadd.f32 %v202, %v225
    %v227 = vrot.slane %v226, 2
    %v228 = vadd.f32 %v226, %v227
    %v229 = vrot.slane %v228, 1
    %v230 = vadd.f32 %v228, %v229
    %v231 = vrot.slane %v205, 4
    %v232 = vadd.f32 %v205, %v231
    %v233 = vrot.slane %v232, 2
    %v234 = vadd.f32 %v232, %v233
    %v235 = vrot.slane %v234, 1
    %v236 = vadd.f32 %v234, %v235
    %v237 = vrot.slane %v208, 4
    %v238 = vadd.f32 %v208, %v237
    %v239 = vrot.slane %v238, 2
    %v240 = vadd.f32 %v238, %v239
    %v241 = vrot.slane %v240, 1
    %v242 = vadd.f32 %v240, %v241
    %v243 = vrot.slane %v211, 4
    %v244 = vadd.f32 %v211, %v243
    %v245 = vrot.slane %v244, 2
    %v246 = vadd.f32 %v244, %v245
    %v247 = vrot.slane %v246, 1
    %v248 = vadd.f32 %v246, %v247
    %v249 = vrot.slane %v214, 4
    %v250 = vadd.f32 %v214, %v249
    %v251 = vrot.slane %v250, 2
    %v252 = vadd.f32 %v250, %v251
    %v253 = vrot.slane %v252, 1
    %v254 = vadd.f32 %v252, %v253
    %v255 = vrot.slane %v217, 4
    %v256 = vadd.f32 %v217, %v255
    %v257 = vrot.slane %v256, 2
    %v258 = vadd.f32 %v256, %v257
    %v259 = vrot.slane %v258, 1
    %v260 = vadd.f32 %v258, %v259
    %v261 = vrot.slane %v220, 4
    %v262 = vadd.f32 %v220, %v261
    %v263 = vrot.slane %v262, 2
    %v264 = vadd.f32 %v262, %v263
    %v265 = vrot.slane %v264, 1
    %v266 = vadd.f32 %v264, %v265
    %v267 = vrot.slane %v223, 4
    %v268 = vadd.f32 %v223, %v267
    %v269 = vrot.slane %v268, 2
    %v270 = vadd.f32 %v268, %v269
    %v271 = vrot.slane %v270, 1
    %v272 = vadd.f32 %v270, %v271
    %v273 = vmul.f32 %v230, 0.125
    %v274 = vmul.f32 %v236, 0.125
    %v275 = vmul.f32 %v242, 0.125
    %v276 = vmul.f32 %v248, 0.125
    %v277 = vmul.f32 %v254, 0.125
    %v278 = vmul.f32 %v260, 0.125
    %v279 = vmul.f32 %v266, 0.125
    %v280 = vmul.f32 %v272, 0.125
    %v281 = vld [vmem:[#allocation7] sm:$0xff]
    %v282 = vld [vmem:[#allocation7 + $0x8] sm:$0xff]
    %v283 = vld [vmem:[#allocation7 + $0x10] sm:$0xff]
    %v284 = vld [vmem:[#allocation7 + $0x18] sm:$0xff]
    %v285 = vld [vmem:[#allocation7 + $0x20] sm:$0xff]
    %v286 = vld [vmem:[#allocation7 + $0x28] sm:$0xff]
    %v287 = vld [vmem:[#allocation7 + $0x30] sm:$0xff]
    %v288 = vld [vmem:[#allocation7 + $0x38] sm:$0xff]
    %v289 = vld [vmem:[#allocation7 + $0x40] sm:$0xff]
    %v290 = vld [vmem:[#allocation7 + $0x48] sm:$0xff]
    %v291 = vld [vmem:[#allocation7 + $0x50] sm:$0xff]
    %v292 = vld [vmem:[#allocation7 + $0x58] sm:$0xff]
    %v293 = vld [vmem:[#allocation7 + $0x60] sm:$0xff]
    %v294 = vld [vmem:[#allocation7 + $0x68] sm:$0xff]
    %v295 = vld [vmem:[#allocation7 + $0x70] sm:$0xff]
    %v296 = vld [vmem:[#allocation7 + $0x78] sm:$0xff]
    %v297 = vld [vmem:[%s3] sm:$0x1]
    %v299 = vperm.slane %v297, 0
    %vm309 = vcmask 1041409
    %v310 = vsel %vm309, %v274, %v273
    %vm311 = vcmask 1042434
    %v312 = vsel %vm311, %v275, %v310
    %vm313 = vcmask 1043459
    %v314 = vsel %vm313, %v276, %v312
    %vm315 = vcmask 1044484
    %v316 = vsel %vm315, %v277, %v314
    %vm317 = vcmask 1045509
    %v318 = vsel %vm317, %v278, %v316
    %vm319 = vcmask 1046534
    %v320 = vsel %vm319, %v279, %v318
    %vm321 = vcmask 1047559
    %v322 = vsel %vm321, %v280, %v320
    %324 = vmatpush.msra.mxu0 %v296
    %325 = vmatpush.msra.mxu0 %v295
    %326 = vmatpush.msra.mxu0 %v294
    %327 = vmatpush.msra.mxu0 %v293
    %328 = vmatpush.msra.mxu0 %v292
    %329 = vmatpush.msra.mxu0 %v291
    %330 = vmatpush.msra.mxu0 %v290
    %331 = vmatpush.msra.mxu0 %v289
    %332 = vmatpush.msra.mxu0 %v288
    %333 = vmatpush.msra.mxu0 %v287
    %334 = vmatpush.msra.mxu0 %v286
    %335 = vmatpush.msra.mxu0 %v285
    %336 = vmatpush.msra.mxu0 %v284
    %337 = vmatpush.msra.mxu0 %v283
    %338 = vmatpush.msra.mxu0 %v282
    %339 = vmatpush.msra.mxu0 %v281
    %340 = vmatmul.f32.gmra.mxu0 %v322
    %v341 = vpop.f32.mrf.mxu0
    %v342 = vadd.f32 %v299, %v341
    %343 = vdwg.mxu0
    %v345 = vrot.slane %v342, 1
    %v346 = vrot.slane %v342, 2
    %v347 = vrot.slane %v342, 3
    %v348 = vrot.slane %v342, 4
    %v349 = vrot.slane %v342, 5
    %v350 = vrot.slane %v342, 6
    %v351 = vrot.slane %v342, 7
    %v352 = vperm.slane %v342, 0
    %v353 = vperm.slane %v345, 0
    %v354 = vperm.slane %v346, 0
    %v355 = vperm.slane %v347, 0
    %v356 = vperm.slane %v348, 0
    %v357 = vperm.slane %v349, 0
    %v358 = vperm.slane %v350, 0
    %v359 = vperm.slane %v351, 0
    %v368 = vmul.f32 %v202, %v352
    %v369 = vmul.f32 %v205, %v353
    %v370 = vmul.f32 %v208, %v354
    %v371 = vmul.f32 %v211, %v355
    %v372 = vmul.f32 %v214, %v356
    %v373 = vmul.f32 %v217, %v357
    %v374 = vmul.f32 %v220, %v358
    %v375 = vmul.f32 %v223, %v359
    %376 = vadd.xlane.f32.xlu0 %v368
    %v377 = vpop.xlane.xlu0 %376
    %378 = vadd.xlane.f32.xlu0 %v369
    %v379 = vpop.xlane.xlu0 %378
    %380 = vadd.xlane.f32.xlu0 %v370
    %v381 = vpop.xlane.xlu0 %380
    %382 = vadd.xlane.f32.xlu0 %v371
    %v383 = vpop.xlane.xlu0 %382
    %384 = vadd.xlane.f32.xlu0 %v372
    %v385 = vpop.xlane.xlu0 %384
    %386 = vadd.xlane.f32.xlu0 %v373
    %v387 = vpop.xlane.xlu0 %386
    %388 = vadd.xlane.f32.xlu0 %v374
    %v389 = vpop.xlane.xlu0 %388
    %390 = vadd.xlane.f32.xlu0 %v375
    %v391 = vpop.xlane.xlu0 %390
    %v400 = vperm.slane %v377, %v87
    %v401 = vperm.slane %v379, %v87
    %v402 = vperm.slane %v381, %v87
    %v403 = vperm.slane %v383, %v87
    %v404 = vperm.slane %v385, %v87
    %v405 = vperm.slane %v387, %v87
    %v406 = vperm.slane %v389, %v87
    %v407 = vperm.slane %v391, %v87
    %v408 = vsel %vm309, %v401, %v400
    %v409 = vsel %vm311, %v402, %v408
    %v410 = vsel %vm313, %v403, %v409
    %v411 = vsel %vm315, %v404, %v410
    %v412 = vsel %vm317, %v405, %v411
    %v413 = vsel %vm319, %v406, %v412
    %v414 = vsel %vm321, %v407, %v413
    %vm416 = vcmask 64512
    %v417 = vsel %vm416, %v414, -inf
    %418 = vmax.xlane.f32.xlu0 %v417
    %v419 = vpop.xlane.xlu0 %418
    %v421 = vperm.slane %v419, 0
    %v422 = vperm.slane %v419, 1
    %v423 = vperm.slane %v419, 2
    %v424 = vperm.slane %v419, 3
    %v425 = vperm.slane %v419, 4
    %v426 = vperm.slane %v419, 5
    %v427 = vperm.slane %v419, 6
    %v428 = vperm.slane %v419, 7
    %v437 = vsub.f32 %v377, %v421
    %v438 = vsub.f32 %v379, %v422
    %v439 = vsub.f32 %v381, %v423
    %v440 = vsub.f32 %v383, %v424
    %v441 = vsub.f32 %v385, %v425
    %v442 = vsub.f32 %v387, %v426
    %v443 = vsub.f32 %v389, %v427
    %v444 = vsub.f32 %v391, %v428
    %v445 = vmul.f32 %v437, 1.442695
    %v446 = vpow.pop %v445
    %v447 = vmul.f32 %v438, 1.442695
    %v448 = vpow.pop %v447
    %v449 = vmul.f32 %v439, 1.442695
    %v450 = vpow.pop %v449
    %v451 = vmul.f32 %v440, 1.442695
    %v452 = vpow.pop %v451
    %v453 = vmul.f32 %v441, 1.442695
    %v454 = vpow.pop %v453
    %v455 = vmul.f32 %v442, 1.442695
    %v456 = vpow.pop %v455
    %v457 = vmul.f32 %v443, 1.442695
    %v458 = vpow.pop %v457
    %v459 = vmul.f32 %v444, 1.442695
    %v460 = vpow.pop %v459
    %469 = vset.pattern.permute.xlu0 0
    %470 = vperm.xlu0 %469, %v446
    %v471 = vpop.permute.xlu0 %470
    %472 = vset.pattern.permute.xlu0 0
    %473 = vperm.xlu0 %472, %v448
    %v474 = vpop.permute.xlu0 %473
    %475 = vset.pattern.permute.xlu0 0
    %476 = vperm.xlu0 %475, %v450
    %v477 = vpop.permute.xlu0 %476
    %478 = vset.pattern.permute.xlu0 0
    %479 = vperm.xlu0 %478, %v452
    %v480 = vpop.permute.xlu0 %479
    %481 = vset.pattern.permute.xlu0 0
    %482 = vperm.xlu0 %481, %v454
    %v483 = vpop.permute.xlu0 %482
    %484 = vset.pattern.permute.xlu0 0
    %485 = vperm.xlu0 %484, %v456
    %v486 = vpop.permute.xlu0 %485
    %487 = vset.pattern.permute.xlu0 0
    %488 = vperm.xlu0 %487, %v458
    %v489 = vpop.permute.xlu0 %488
    %490 = vset.pattern.permute.xlu0 0
    %491 = vperm.xlu0 %490, %v460
    %v492 = vpop.permute.xlu0 %491
    %v493 = vperm.slane %v471, %v87
    %v494 = vperm.slane %v474, %v87
    %v495 = vperm.slane %v477, %v87
    %v496 = vperm.slane %v480, %v87
    %v497 = vperm.slane %v483, %v87
    %v498 = vperm.slane %v486, %v87
    %v499 = vperm.slane %v489, %v87
    %v500 = vperm.slane %v492, %v87
    %v501 = vsel %vm309, %v494, %v493
    %v502 = vsel %vm311, %v495, %v501
    %v503 = vsel %vm313, %v496, %v502
    %v504 = vsel %vm315, %v497, %v503
    %v505 = vsel %vm317, %v498, %v504
    %v506 = vsel %vm319, %v499, %v505
    %v507 = vsel %vm321, %v500, %v506
    %v509 = vsel %vm416, %v507, 0.0
    %510 = vadd.xlane.f32.xlu0 %v509
    %v511 = vpop.xlane.xlu0 %510
    %v512 = vrcp.pop %v511
    %v513 = vmul.f32 %v511, %v512
    %v514 = vsub.f32 2.0, %v513
    %v515 = vmul.f32 %v512, %v514
    %v517 = vperm.slane %v515, 0
    %v518 = vperm.slane %v515, 1
    %v519 = vperm.slane %v515, 2
    %v520 = vperm.slane %v515, 3
    %v521 = vperm.slane %v515, 4
    %v522 = vperm.slane %v515, 5
    %v523 = vperm.slane %v515, 6
    %v524 = vperm.slane %v515, 7
    %v533 = vmul.f32 %v446, %v517
    %v534 = vmul.f32 %v448, %v518
    %v535 = vmul.f32 %v450, %v519
    %v536 = vmul.f32 %v452, %v520
    %v537 = vmul.f32 %v454, %v521
    %v538 = vmul.f32 %v456, %v522
    %v539 = vmul.f32 %v458, %v523
    %v540 = vmul.f32 %v460, %v524
    %542 = vset.pattern.permute.xlu0 0
    %543 = vperm.xlu0 %542, %v533
    %v544 = vpop.permute.xlu0 %543
    %547 = vset.pattern.permute.xlu0 0
    %548 = vperm.xlu0 %547, %v534
    %v549 = vpop.permute.xlu0 %548
    %552 = vset.pattern.permute.xlu0 0
    %553 = vperm.xlu0 %552, %v535
    %v554 = vpop.permute.xlu0 %553
    %557 = vset.pattern.permute.xlu0 0
    %558 = vperm.xlu0 %557, %v536
    %v559 = vpop.permute.xlu0 %558
    %562 = vset.pattern.permute.xlu0 0
    %563 = vperm.xlu0 %562, %v537
    %v564 = vpop.permute.xlu0 %563
    %567 = vset.pattern.permute.xlu0 0
    %568 = vperm.xlu0 %567, %v538
    %v569 = vpop.permute.xlu0 %568
    %572 = vset.pattern.permute.xlu0 0
    %573 = vperm.xlu0 %572, %v539
    %v574 = vpop.permute.xlu0 %573
    %577 = vset.pattern.permute.xlu0 0
    %578 = vperm.xlu0 %577, %v540
    %v579 = vpop.permute.xlu0 %578
    %v581 = vmul.f32 %v202, %v544
    %v582 = vmul.f32 %v205, %v549
    %v583 = vmul.f32 %v208, %v554
    %v584 = vmul.f32 %v211, %v559
    %v585 = vmul.f32 %v214, %v564
    %v586 = vmul.f32 %v217, %v569
    %v587 = vmul.f32 %v220, %v574
    %v588 = vmul.f32 %v223, %v579
    %v589 = vrot.slane %v581, 4
    %v590 = vadd.f32 %v581, %v589
    %v591 = vrot.slane %v590, 2
    %v592 = vadd.f32 %v590, %v591
    %v593 = vrot.slane %v592, 1
    %v594 = vadd.f32 %v592, %v593
    %v595 = vrot.slane %v582, 4
    %v596 = vadd.f32 %v582, %v595
    %v597 = vrot.slane %v596, 2
    %v598 = vadd.f32 %v596, %v597
    %v599 = vrot.slane %v598, 1
    %v600 = vadd.f32 %v598, %v599
    %v601 = vrot.slane %v583, 4
    %v602 = vadd.f32 %v583, %v601
    %v603 = vrot.slane %v602, 2
    %v604 = vadd.f32 %v602, %v603
    %v605 = vrot.slane %v604, 1
    %v606 = vadd.f32 %v604, %v605
    %v607 = vrot.slane %v584, 4
    %v608 = vadd.f32 %v584, %v607
    %v609 = vrot.slane %v608, 2
    %v610 = vadd.f32 %v608, %v609
    %v611 = vrot.slane %v610, 1
    %v612 = vadd.f32 %v610, %v611
    %v613 = vrot.slane %v585, 4
    %v614 = vadd.f32 %v585, %v613
    %v615 = vrot.slane %v614, 2
    %v616 = vadd.f32 %v614, %v615
    %v617 = vrot.slane %v616, 1
    %v618 = vadd.f32 %v616, %v617
    %v619 = vrot.slane %v586, 4
    %v620 = vadd.f32 %v586, %v619
    %v621 = vrot.slane %v620, 2
    %v622 = vadd.f32 %v620, %v621
    %v623 = vrot.slane %v622, 1
    %v624 = vadd.f32 %v622, %v623
    %v625 = vrot.slane %v587, 4
    %v626 = vadd.f32 %v587, %v625
    %v627 = vrot.slane %v626, 2
    %v628 = vadd.f32 %v626, %v627
    %v629 = vrot.slane %v628, 1
    %v630 = vadd.f32 %v628, %v629
    %v631 = vrot.slane %v588, 4
    %v632 = vadd.f32 %v588, %v631
    %v633 = vrot.slane %v632, 2
    %v634 = vadd.f32 %v632, %v633
    %v635 = vrot.slane %v634, 1
    %v636 = vadd.f32 %v634, %v635
    %v637 = vld [vmem:[#allocation8] sm:$0xff]
    %v638 = vld [vmem:[#allocation8 + $0x8] sm:$0xff]
    %v639 = vld [vmem:[#allocation8 + $0x10] sm:$0xff]
    %v640 = vld [vmem:[#allocation8 + $0x18] sm:$0xff]
    %v641 = vld [vmem:[#allocation8 + $0x20] sm:$0xff]
    %v642 = vld [vmem:[#allocation8 + $0x28] sm:$0xff]
    %v643 = vld [vmem:[#allocation8 + $0x30] sm:$0xff]
    %v644 = vld [vmem:[#allocation8 + $0x38] sm:$0xff]
    %v645 = vld [vmem:[#allocation8 + $0x40] sm:$0xff]
    %v646 = vld [vmem:[#allocation8 + $0x48] sm:$0xff]
    %v647 = vld [vmem:[#allocation8 + $0x50] sm:$0xff]
    %v648 = vld [vmem:[#allocation8 + $0x58] sm:$0xff]
    %v649 = vld [vmem:[#allocation8 + $0x60] sm:$0xff]
    %v650 = vld [vmem:[#allocation8 + $0x68] sm:$0xff]
    %v651 = vld [vmem:[#allocation8 + $0x70] sm:$0xff]
    %v652 = vld [vmem:[#allocation8 + $0x78] sm:$0xff]
    %v653 = vld [vmem:[%s5] sm:$0x1]
    %v655 = vperm.slane %v653, 0
    %v665 = vsel %vm309, %v600, %v594
    %v666 = vsel %vm311, %v606, %v665
    %v667 = vsel %vm313, %v612, %v666
    %v668 = vsel %vm315, %v618, %v667
    %v669 = vsel %vm317, %v624, %v668
    %v670 = vsel %vm319, %v630, %v669
    %v671 = vsel %vm321, %v636, %v670
    %673 = vmatpush.msra.mxu0 %v652
    %674 = vmatpush.msra.mxu0 %v651
    %675 = vmatpush.msra.mxu0 %v650
    %676 = vmatpush.msra.mxu0 %v649
    %677 = vmatpush.msra.mxu0 %v648
    %678 = vmatpush.msra.mxu0 %v647
    %679 = vmatpush.msra.mxu0 %v646
    %680 = vmatpush.msra.mxu0 %v645
    %681 = vmatpush.msra.mxu0 %v644
    %682 = vmatpush.msra.mxu0 %v643
    %683 = vmatpush.msra.mxu0 %v642
    %684 = vmatpush.msra.mxu0 %v641
    %685 = vmatpush.msra.mxu0 %v640
    %686 = vmatpush.msra.mxu0 %v639
    %687 = vmatpush.msra.mxu0 %v638
    %688 = vmatpush.msra.mxu0 %v637
    %689 = vmatmul.f32.gmra.mxu0 %v671
    %v690 = vpop.f32.mrf.mxu0
    %v691 = vadd.f32 %v655, %v690
    %692 = vdwg.mxu0
    %693 = vst [vmem:[#allocation10] sm:$0xff] %v691
    // Predicated region
    $region42: #{tpu_custom_call.1} parent=1 // pred_check
      _
    $region43: #{tpu_custom_call.1} parent=1 // pred_check_branch
      %695 = sbr.rel (0) target = $region45
    $region44: #{tpu_custom_call.1} parent=1 // pred_region
      %697 = vsyncadd [#allocation4], 0
      %s699 = sshll.u32 [#allocation10], 4
      %s700 = int_to_ptr.vmem [resolvable:$true] %s699
      %s701 = sshll.u32 %s6, 4
      %s702 = int_to_ptr.hbm [resolvable:$true] %s701
      %704 = dma.vmem_to_hbm [thread:$0]  %s700, 128, %s702, [#allocation4]
    $region45: #{tpu_custom_call.1} parent=1 // pred_fallthru
      _
    // Predicated region
    $region46: #{tpu_custom_call.1} parent=1 // pred_check
      _
    $region47: #{tpu_custom_call.1} parent=1 // pred_check_branch
      %706 = sbr.rel (0) target = $region49
    $region48: #{tpu_custom_call.1} parent=1 // pred_region
      %708 = dma.done [#allocation4], 128
    $region49: #{tpu_custom_call.1} parent=1 // pred_fallthru
      _
    %709 = vsyncpa [#allocation3], 1
    %710 = vsyncpa [#allocation6], 1
    %711 = vsyncpa [#allocation9], 1
    %712 = vsyncpa [#allocation4], 1

</llo_original>
